<compile_context>
chip_gen: v5e
topology: v5e:2x2
jax: 0.10.0
libtpu: 0.0.40
codegen_flags: <defaults>
</compile_context>

<pallas_src>
import functools

import jax
import jax.numpy as jnp
from jax.experimental import pallas as pl
from jax.experimental.pallas import tpu as pltpu


# Double-buffered output VMEM budget used to size the S tile (real bytes,
# before the 8-sublane padding of the class axis).
_OUT_BUF_BUDGET_BYTES = 8 * 1024 * 1024


def _round_up(x, m):
    return (x + m - 1) // m * m


def _ls_kernel(labels_ref, out_ref, *, on_val, off_val, num_classes):
    """labels_ref: (1, 1, T) narrow-int VMEM; out_ref: (1, C, T) VMEM."""
    labels = labels_ref[...].astype(jnp.int32)                       # (1, 1, T)
    # Hoisted class-id constant: per-sublane iota, lane-broadcast in the
    # compare instead of a full (1, C, T) iota every grid step.
    cls_ids = jax.lax.broadcasted_iota(jnp.int32, (1, num_classes, 1), 1)
    hit = labels == cls_ids                                          # (1, C, T)
    on = jnp.asarray(on_val, dtype=out_ref.dtype)
    off = jnp.asarray(off_val, dtype=out_ref.dtype)
    # One dense, lane-aligned whole-block store (partial final block is masked
    # by Pallas).
    out_ref[...] = jnp.where(hit, on, off)


def label_smoothing(labels, num_classes, smoothing, out_dtype=jnp.float32):
    """labels: (N, D, H, W) int -> (N, C, D, H, W) smoothed one-hot."""
    N, D, H, W = labels.shape
    S = D * H * W

    # --- tile sizing ------------------------------------------------------
    c_pad = _round_up(num_classes, 8)          # sublane padding of out buffer
    out_bytes = jnp.dtype(out_dtype).itemsize
    max_tile = max(
        128, (_OUT_BUF_BUDGET_BYTES // (2 * c_pad * out_bytes)) // 128 * 128
    )
    s_tile = min(max_tile, _round_up(S, 128))
    if N == 1:
        # Keep >= 2 grid programs so v7x megacore can split the work.
        s_tile = min(s_tile, max(128, _round_up(pl.cdiv(S, 2), 128)))

    # --- narrow label stream (bandwidth) ------------------------------------
    # Valid class ids (0..C-1) are representable exactly; only out-of-range
    # labels (which produce all-off rows anyway) could differ after the cast.
    if num_classes <= 127:
        lab_dtype = jnp.int8
    elif num_classes <= 32767:
        lab_dtype = jnp.int16
    else:
        lab_dtype = jnp.int32
    labels_flat = labels.reshape(N, 1, S).astype(lab_dtype)

    kernel = functools.partial(
        _ls_kernel,
        on_val=(1.0 - smoothing) + smoothing / num_classes,
        off_val=smoothing / num_classes,
        num_classes=num_classes,
    )

    cost = pl.CostEstimate(
        flops=N * num_classes * S,
        transcendentals=0,
        bytes_accessed=N * S * jnp.dtype(lab_dtype).itemsize
        + N * num_classes * S * out_bytes,
    )

    grid = (N, pl.cdiv(S, s_tile))
    out = pl.pallas_call(
        kernel,
        out_shape=jax.ShapeDtypeStruct((N, num_classes, S), out_dtype),
        grid_spec=pltpu.PrefetchScalarGridSpec(
            num_scalar_prefetch=0,
            grid=grid,
            in_specs=[
                pl.BlockSpec((1, 1, s_tile), lambda n, s: (n, 0, s)),
            ],
            out_specs=pl.BlockSpec(
                (1, num_classes, s_tile), lambda n, s: (n, 0, s)
            ),
        ),
        compiler_params=pltpu.CompilerParams(
            dimension_semantics=("parallel", "parallel"),
            vmem_limit_bytes=32 * 1024 * 1024,
        ),
        cost_estimate=cost,
    )(labels_flat)

    # (N, C, S) -> (N, C, D, H, W): contiguous, free reshape.
    return out.reshape(N, num_classes, D, H, W)


def _reference(labels, num_classes, smoothing):
    """Pure-JAX reference mirroring the PyTorch forward exactly."""
    cls_idx = jnp.arange(num_classes).reshape(1, num_classes)
    oh = labels[..., None] == cls_idx                     # (N, D, H, W, C)
    oh = jnp.transpose(oh, (0, 4, 1, 2, 3)).astype(jnp.float32)
    return oh * (1.0 - smoothing) + smoothing / num_classes


if __name__ == "__main__":
    num_classes = 5
    smoothing = 0.1
    key = jax.random.PRNGKey(0)

    # Case 1: lane-friendly shape (D*H*W = 512, multiple of 128).
    k1, k2 = jax.random.split(key)
    labels_a = jax.random.randint(k1, (2, 4, 8, 16), 0, num_classes, dtype=jnp.int32)
    out_a = jax.block_until_ready(label_smoothing(labels_a, num_classes, smoothing))
    ref_a = _reference(labels_a, num_classes, smoothing)
    assert out_a.shape == (2, num_classes, 4, 8, 16), out_a.shape
    assert out_a.dtype == jnp.float32
    assert jnp.allclose(out_a, ref_a, atol=1e-6), "mismatch vs reference (case 1)"

    # Case 2: D*H*W = 105, NOT a multiple of 128 -> exercises the masked
    # partial final block (no pad-and-slice copy anymore).
    labels_b = jax.random.randint(k2, (2, 3, 5, 7), 0, num_classes, dtype=jnp.int32)
    out_b = jax.block_until_ready(label_smoothing(labels_b, num_classes, smoothing))
    ref_b = _reference(labels_b, num_classes, smoothing)
    assert out_b.shape == (2, num_classes, 3, 5, 7), out_b.shape
    assert jnp.allclose(out_b, ref_b, atol=1e-6), "mismatch vs reference (case 2)"

    print("KERNEL_OK")
</pallas_src>

<mosaic_0001>
module attributes {stable_mosaic.version = 11 : i64} {
  func.func @_ls_kernel(%arg0: i32, %arg1: i32, %arg2: memref<1x1x512xi8, #tpu.memory_space<vmem>>, %arg3: memref<1x5x512xf32, #tpu.memory_space<vmem>>) attributes {dimension_semantics = [#tpu.dimension_semantics<parallel>, #tpu.dimension_semantics<parallel>], iteration_bounds = array<i64: 2, 1>, scalar_prefetch = 0 : i64, scratch_operands = 0 : i64, tpu.core_type = #tpu.core_type<tc>, window_params = [{transform_indices = @transform_0, window_bounds = array<i64: 1, 1, 512>}, {transform_indices = @transform_1, window_bounds = array<i64: 1, 5, 512>}]} {
    %c0 = arith.constant 0 : index
    %c0_0 = arith.constant 0 : index
    %c0_1 = arith.constant 0 : index
    %0 = vector.load %arg2[%c0, %c0_0, %c0_1] : memref<1x1x512xi8, #tpu.memory_space<vmem>>, vector<1x1x512xi8>
    %1 = arith.extsi %0 : vector<1x1x512xi8> to vector<1x1x512xi32>
    %2 = tpu.iota {dimensions = array<i32: 1>} : vector<1x5x1xi32>
    %3 = vector.broadcast %1 : vector<1x1x512xi32> to vector<1x5x512xi32>
    %4 = vector.broadcast %2 : vector<1x5x1xi32> to vector<1x5x512xi32>
    %5 = arith.cmpi eq, %3, %4 : vector<1x5x512xi32>
    %cst = arith.constant 9.200000e-01 : f32
    %cst_2 = arith.constant 2.000000e-02 : f32
    %6 = vector.broadcast %cst : f32 to vector<1x5x512xf32>
    %7 = vector.broadcast %cst_2 : f32 to vector<1x5x512xf32>
    %8 = arith.select %5, %6, %7 : vector<1x5x512xi1>, vector<1x5x512xf32>
    %c0_3 = arith.constant 0 : index
    %c0_4 = arith.constant 0 : index
    %c0_5 = arith.constant 0 : index
    %9 = vector.load %arg3[%c0_3, %c0_4, %c0_5] : memref<1x5x512xf32, #tpu.memory_space<vmem>>, vector<1x5x512xf32>
    tpu.vector_store %arg3[%c0_3, %c0_4, %c0_5], %8 {strides = array<i32>} : memref<1x5x512xf32, #tpu.memory_space<vmem>>, vector<1x5x512xf32>,
    return
  }
  func.func @transform_0(%arg0: i32, %arg1: i32) -> (i32, i32, i32) {
    %c0_i32 = arith.constant 0 : i32
    %c0_i32_0 = arith.constant 0 : i32
    return %arg0, %c0_i32, %arg1 : i32, i32, i32
  }
  func.func @transform_1(%arg0: i32, %arg1: i32) -> (i32, i32, i32) {
    %c0_i32 = arith.constant 0 : i32
    %c0_i32_0 = arith.constant 0 : i32
    return %arg0, %c0_i32, %arg1 : i32, i32, i32
  }
}

</mosaic_0001>

<llo_original>
// kernel: tpu_custom_call.1
$region0: #{tpu_custom_call.1}
  #allocation0 [shape = 'u32[]', space=smem, size = 0x4, offset = 0x4, fixed_abs, tag = 'smem constant byte address 0x4 - core index']
  #allocation1 [shape = 'u32[72,128]{1,0:T(1,128)}', space=vmem, size = 0x9000, scoped, tag = 'internal scratch']
  %s0 = inlined_call_operand.vmem [shape: s8[2,1,512], index: 0, kind: input, shape index: {}]
  %s1 = inlined_call_operand.vmem [shape: f32[2,5,512], index: 1, kind: output, shape index: {}]
  %s2 = sld [smem:[#allocation0]]
  $region37: #{tpu_custom_call.1} parent=0
    _
  %s4 = ssub.s32 1, %s2
  %s5 = scalar_select 0, %s4, %s2
  loop: start=0, step=1, limit=4
  $region2: #{tpu_custom_call.1} parent=0 // loop_pre_header
    _
  $region3: #{tpu_custom_call.1} parent=0 // loop_header
    %s7 = sphi 0, %s11
    %p8 = scmp.ge.s32.totalorder %s7, 4
    %s14 = sphi 0, %s26
    %s15 = sphi 0, %s22
    %s16 = sphi 0, %s14
    %s17 = sphi 0, %s15
    %s18 = sphi 0, %s16
    %s19 = sphi 0, %s17
    %s31 = sphi 0, %s33
    %s34 = sphi 0, %s31
    %s35 = sphi 0, %s34
    %s51 = sphi 0, %s35
    %s59 = sphi 0, %s61
    %s62 = sphi 0, %s59
    %s63 = sphi 0, %s62
    %s79 = sphi 0, %s63
  $region4: #{tpu_custom_call.1} parent=0 // loop_header_branch
    %10 = sbr.rel (%p8) target = $region8
  $region5: #{tpu_custom_call.1} parent=0 // loop_body
    %s12 = ssub.s32 %s7, 1
    %s13 = ssub.s32 %s7, 2
    %s20 = sadd.s32 1, %s15
    %p21 = scmp.ge.s32.totalorder %s20, 1
    %s22 = scalar_select %p21, 0, %s20
    %s23 = sadd.s32 1, %s14
    %s24 = scalar_select %p21, %s23, %s14
    %p25 = scmp.ge.s32.totalorder %s24, 2
    %s26 = scalar_select %p25, 0, %s24
    %s27 = ssub.s32 %s14, %s26
    %s28 = ssub.s32 %s15, %s22
    %s29 = sor.u32 %s27, %s28
    %p30 = scmp.eq.s32.totalorder %s29, 0
    %s32 = sadd.s32 %s31, 1
    %s33 = scalar_select %p30, %s31, %s32
    %p36 = pneg %p30
    %p37 = scmp.eq.s32.totalorder %s7, 1
    %p38 = por %p36, %p37
    %p39 = scmp.ne.s32.totalorder %s31, %s34
    %p40 = scmp.eq.s32.totalorder %s7, 0
    %p41 = por %p39, %p40
    %p42 = scmp.ne.s32.totalorder %s31, %s34
    %p43 = scmp.eq.s32.totalorder %s12, 1
    %p44 = por %p42, %p43
    %p45 = scmp.ne.s32.totalorder %s34, %s35
    %p46 = scmp.eq.s32.totalorder %s12, 0
    %p47 = por %p45, %p46
    %p48 = scmp.ne.s32.totalorder %s34, %s35
    %p49 = scmp.eq.s32.totalorder %s13, 1
    %p50 = por %p48, %p49
    %p52 = scmp.ne.s32.totalorder %s35, %s51
    %p53 = scmp.eq.s32.totalorder %s13, 0
    %p54 = por %p52, %p53
    %s55 = ssub.s32 %s14, %s26
    %s56 = ssub.s32 %s15, %s22
    %s57 = sor.u32 %s55, %s56
    %p58 = scmp.eq.s32.totalorder %s57, 0
    %s60 = sadd.s32 %s59, 1
    %s61 = scalar_select %p58, %s59, %s60
    %p64 = pneg %p58
    %p65 = scmp.eq.s32.totalorder %s7, 1
    %p66 = por %p64, %p65
    %p67 = scmp.ne.s32.totalorder %s59, %s62
    %p68 = scmp.eq.s32.totalorder %s7, 0
    %p69 = por %p67, %p68
    %p70 = scmp.ne.s32.totalorder %s59, %s62
    %p71 = scmp.eq.s32.totalorder %s12, 1
    %p72 = por %p70, %p71
    %p73 = scmp.ne.s32.totalorder %s62, %s63
    %p74 = scmp.eq.s32.totalorder %s12, 0
    %p75 = por %p73, %p74
    %p76 = scmp.ne.s32.totalorder %s62, %s63
    %p77 = scmp.eq.s32.totalorder %s13, 1
    %p78 = por %p76, %p77
    %p80 = scmp.ne.s32.totalorder %s63, %s79
    %p81 = scmp.eq.s32.totalorder %s13, 0
    %p82 = por %p80, %p81
    %p83 = scmp.le.s32.totalorder 1, %s7
    %p84 = scmp.lt.s32.totalorder %s7, 3
    %p85 = pnand %p83, %p84
    %p86 = pneg %p85
    // Predicated region
    $region9: #{tpu_custom_call.1} parent=5 // pred_check
      _
    $region10: #{tpu_custom_call.1} parent=5 // pred_check_branch
      %88 = sbr.rel (%p85) target = $region12
    $region11: #{tpu_custom_call.1} parent=5 // pred_region
      %s89 = ssub.s32 %s7, 1
    $region12: #{tpu_custom_call.1} parent=5 // pred_fallthru
      _
    %p90 = scmp.lt.s32.totalorder %s7, 2
    // Predicated region
    $region13: #{tpu_custom_call.1} parent=5 // pred_check
      %p91 = pneg %p90
    $region14: #{tpu_custom_call.1} parent=5 // pred_check_branch
      %93 = sbr.rel (%p91) target = $region16
    $region15: #{tpu_custom_call.1} parent=5 // pred_region
      // Predicated region
      $region17: #{tpu_custom_call.1} parent=15 // pred_check
        %p94 = pneg %p41
      $region18: #{tpu_custom_call.1} parent=15 // pred_check_branch
        %96 = sbr.rel (%p94) target = $region20
      $region19: #{tpu_custom_call.1} parent=15 // pred_region
        %s97 = smul.u32 4, %s15
        %p98 = scmp.lt.s32.totalorder %s14, 1
        %s99 = scalar_select %p98, %s14, 1
        %p100 = scmp.lt.s32.totalorder %s97, 3
        %s101 = scalar_select %p100, %s97, 3
        %s102 = smul.addr %s99, 4
        %s103 = sadd.s32 %s101, %s102
        %s104 = scalar_lea.vmem %s0, %s103
        %s105 = smul.u32 4, %s15
      $region20: #{tpu_custom_call.1} parent=15 // pred_fallthru
        _
    $region16: #{tpu_custom_call.1} parent=5 // pred_fallthru
      _
    %p106 = scmp.le.s32.totalorder 1, %s7
    %p107 = scmp.lt.s32.totalorder %s7, 3
    %p108 = pnand %p106, %p107
    %p109 = pneg %p108
    // Predicated region
    $region21: #{tpu_custom_call.1} parent=5 // pred_check
      _
    $region22: #{tpu_custom_call.1} parent=5 // pred_check_branch
      %111 = sbr.rel (%p108) target = $region24
    $region23: #{tpu_custom_call.1} parent=5 // pred_region
      %s112 = ssub.s32 %s7, 1
      %s113 = smul.u32 4, %s17
      %p114 = scmp.lt.s32.totalorder %s16, 1
      %s115 = scalar_select %p114, %s16, 1
      %p116 = scmp.lt.s32.totalorder %s113, 3
      %s117 = scalar_select %p116, %s113, 3
      %s118 = smul.addr %s115, 4
      %s119 = sadd.s32 %s117, %s118
      %s120 = scalar_lea.vmem %s0, %s119
      %p121 = pneg %p47
      %p122 = pneg %p44
      %p123 = pneg %p75
      %p124 = pneg %p72
      %s125 = smul.u32 4, %s17
      %p126 = scmp.lt.s32.totalorder %s16, 1
      %s127 = scalar_select %p126, %s16, 1
      %p128 = scmp.lt.s32.totalorder %s125, 3
      %s129 = scalar_select %p128, %s125, 3
      %s130 = smul.addr %s127, 4
      %s131 = sadd.s32 %s129, %s130
      %s132 = smul.addr %s131, 8
      %s133 = scalar_lea.vmem %s1, %s132
      %s134 = smul.u32 4, %s17
      %p135 = scmp.lt.s32.totalorder %s16, 1
      %s136 = scalar_select %p135, %s16, 1
      %p137 = scmp.lt.s32.totalorder %s134, 3
      %s138 = scalar_select %p137, %s134, 3
      %s139 = smul.addr %s136, 4
      %s140 = sadd.s32 %s138, %s139
      %s141 = scalar_lea.vmem %s0, %s140
      %s142 = smul.u32 4, %s17
      %s143 = smul.u32 4, %s17
      %p144 = scmp.lt.s32.totalorder %s16, 1
      %s145 = scalar_select %p144, %s16, 1
      %p146 = scmp.lt.s32.totalorder %s143, 3
      %s147 = scalar_select %p146, %s143, 3
      %s148 = smul.addr %s145, 4
      %s149 = sadd.s32 %s147, %s148
      %s150 = smul.addr %s149, 8
      %s151 = scalar_lea.vmem %s1, %s150
      %s152 = smul.u32 4, %s17
      %v153 = vld [vmem:[%s141] sm:$0xf]
      %v154 = vunpack.c.0.s8 %v153
      %v155 = vunpack.c.1.s8 %v153
      %v156 = vlaneseq
      %v157 = vshrl.u32 %v156, 7
      %v158 = vperm.slane %v154, 0
      %v159 = vperm.slane %v154, 4
      %v160 = vperm.slane %v155, 0
      %v161 = vperm.slane %v155, 4
      %v162 = vperm.slane %v158, 0
      %v163 = vperm.slane %v159, 0
      %v164 = vperm.slane %v160, 0
      %v165 = vperm.slane %v161, 0
      %vm166 = vcmp.eq.s32.totalorder %v162, %v157
      %vm167 = vcmp.eq.s32.totalorder %v163, %v157
      %vm168 = vcmp.eq.s32.totalorder %v164, %v157
      %vm169 = vcmp.eq.s32.totalorder %v165, %v157
      %v170 = vsel %vm166, 0.92, 0.02
      %v171 = vsel %vm167, 0.92, 0.02
      %v172 = vsel %vm168, 0.92, 0.02
      %v173 = vsel %vm169, 0.92, 0.02
      %174 = vst [vmem:[%s151] sm:$0x1f] %v170
      %175 = vst [vmem:[%s151 + $0x8] sm:$0x1f] %v171
      %176 = vst [vmem:[%s151 + $0x10] sm:$0x1f] %v172
      %177 = vst [vmem:[%s151 + $0x18] sm:$0x1f] %v173
      %s178 = smul.u32 4, %s17
      %p179 = scmp.lt.s32.totalorder %s16, 1
      %s180 = scalar_select %p179, %s16, 1
      %p181 = scmp.lt.s32.totalorder %s178, 3
      %s182 = scalar_select %p181, %s178, 3
      %s183 = smul.addr %s180, 4
      %s184 = sadd.s32 %s182, %s183
      %s185 = smul.addr %s184, 8
      %s186 = scalar_lea.vmem %s1, %s185
      // Predicated region
      $region25: #{tpu_custom_call.1} parent=23 // pred_check
        %p187 = pneg %p72
      $region26: #{tpu_custom_call.1} parent=23 // pred_check_branch
        %189 = sbr.rel (%p187) target = $region28
      $region27: #{tpu_custom_call.1} parent=23 // pred_region
        %s190 = smul.u32 4, %s17
      $region28: #{tpu_custom_call.1} parent=23 // pred_fallthru
        _
    $region24: #{tpu_custom_call.1} parent=5 // pred_fallthru
      _
    %p191 = scmp.le.s32.totalorder 2, %s7
    // Predicated region
    $region29: #{tpu_custom_call.1} parent=5 // pred_check
      %p192 = pneg %p191
    $region30: #{tpu_custom_call.1} parent=5 // pred_check_branch
      %194 = sbr.rel (%p192) target = $region32
    $region31: #{tpu_custom_call.1} parent=5 // pred_region
      %s195 = ssub.s32 %s7, 2
      // Predicated region
      $region33: #{tpu_custom_call.1} parent=31 // pred_check
        %p196 = pneg %p78
      $region34: #{tpu_custom_call.1} parent=31 // pred_check_branch
        %198 = sbr.rel (%p196) target = $region36
      $region35: #{tpu_custom_call.1} parent=31 // pred_region
        %s199 = smul.u32 4, %s19
        %p200 = scmp.lt.s32.totalorder %s18, 1
        %s201 = scalar_select %p200, %s18, 1
        %p202 = scmp.lt.s32.totalorder %s199, 3
        %s203 = scalar_select %p202, %s199, 3
        %s204 = smul.addr %s201, 4
        %s205 = sadd.s32 %s203, %s204
        %s206 = smul.addr %s205, 8
        %s207 = scalar_lea.vmem %s1, %s206
      $region36: #{tpu_custom_call.1} parent=31 // pred_fallthru
        _
    $region32: #{tpu_custom_call.1} parent=5 // pred_fallthru
      _
  $region6: #{tpu_custom_call.1} parent=0 // loop_footer
    %s11 = sadd.s32 1, %s7
  $region7: #{tpu_custom_call.1} parent=0 // loop_footer_branch
    %6 = sbr.rel target = $region3
  $region8: #{tpu_custom_call.1} parent=0 // loop_exit
    _

</llo_original>
